<compile_context>
chip_gen: v5e
topology: v5e:2x2
jax: 0.10.0
libtpu: 0.0.40
codegen_flags: <defaults>
</compile_context>

<pallas_src>
import math
import jax
import jax.numpy as jnp
from jax.experimental import pallas as pl
from jax.experimental.pallas import tpu as pltpu

SUBLANE_F32 = 8
SUBLANE_BF16 = 16


def _round_up(x, m):
    return ((x + m - 1) // m) * m


def diag_gaussian_kernel(x_ref, w_ref, b_ref, mean_ref):
    # action_mean = x @ W + b : one MXU matmul (f32 accumulation) + VPU bias
    # add per batch tile.  W and bias are held resident (constant index_map).
    acc = jnp.dot(x_ref[...], w_ref[...], preferred_element_type=jnp.float32)
    mean_ref[...] = (acc + b_ref[...]).astype(mean_ref.dtype)


def diag_gaussian_forward(x, w, b, logstd, *, max_tile_b=1024, compute_dtype=None):
    """x: [B, num_inputs], w: [num_inputs, num_outputs] (pre-transposed),
    b: [1, num_outputs], logstd: [1, num_outputs].

    Returns (action_mean [B, N] f32, action_logstd [B, N] f32).

    compute_dtype=jnp.bfloat16 halves x/W HBM read traffic on v5e/v6e/v7x
    (f32 accumulation is kept via preferred_element_type); default f32 for
    exact parity with the PyTorch reference."""
    B, K = x.shape
    N = w.shape[1]

    if compute_dtype is not None:
        x = x.astype(compute_dtype)
        w = w.astype(compute_dtype)
    b = b.reshape(1, N).astype(jnp.float32)

    # bf16 packs 16 rows per vreg sublane group; f32 packs 8.
    sub = SUBLANE_BF16 if x.dtype == jnp.bfloat16 else SUBLANE_F32

    # Right-size the batch tile:
    #  - tiny B: single full block (no-grid fast path).
    #  - otherwise: >= 2 grid steps (megacore sharding on v7x), tile capped at
    #    max_tile_b, and sized so B_pad does not overshoot by ~a whole tile.
    if B <= sub:
        tile_b = sub
        n_tiles = 1
    else:
        n_tiles = max(2, pl.cdiv(B, max_tile_b))
        tile_b = _round_up(pl.cdiv(B, n_tiles), sub)
        n_tiles = pl.cdiv(B, tile_b)
    b_pad = tile_b * n_tiles

    if b_pad != B:
        # Batch-only zero pad (K/N are never padded); padded rows are sliced
        # off the output below and contribute nothing.
        x = jnp.pad(x, ((0, b_pad - B), (0, 0)))

    itemsize = jnp.dtype(x.dtype).itemsize
    cost = pl.CostEstimate(
        flops=2 * b_pad * K * N,
        transcendentals=0,
        bytes_accessed=int(itemsize * (b_pad * K + K * N) + 4 * (N + b_pad * N)),
    )

    mean_pad = pl.pallas_call(
        diag_gaussian_kernel,
        out_shape=jax.ShapeDtypeStruct((b_pad, N), jnp.float32),
        grid=(n_tiles,),
        in_specs=[
            pl.BlockSpec((tile_b, K), lambda i: (i, 0)),   # x batch tile (K = full dim)
            pl.BlockSpec((K, N), lambda i: (0, 0)),        # full W, resident
            pl.BlockSpec((1, N), lambda i: (0, 0)),        # bias row, resident
        ],
        out_specs=pl.BlockSpec((tile_b, N), lambda i: (i, 0)),
        compiler_params=pltpu.CompilerParams(
            dimension_semantics=("parallel",)),
        cost_estimate=cost,
    )(x, w, b)

    action_mean = mean_pad if b_pad == B else mean_pad[:B]
    # logstd is a constant row: broadcast outside the kernel (free for XLA),
    # instead of writing B*N redundant values back to HBM from the kernel.
    action_logstd = jnp.broadcast_to(
        logstd.reshape(1, N).astype(jnp.float32), (B, N))
    return action_mean, action_logstd


if __name__ == "__main__":
    # Small shapes consistent with the module: num_inputs=32, num_outputs=16, batch=8.
    B, num_inputs, num_outputs = 8, 32, 16

    key = jax.random.PRNGKey(0)
    kx, kw, kb, kx2 = jax.random.split(key, 4)

    # Deterministic init mimicking nn.Linear default U(-1/sqrt(in), 1/sqrt(in)).
    bound = 1.0 / math.sqrt(num_inputs)
    w = jax.random.uniform(kw, (num_inputs, num_outputs), jnp.float32, -bound, bound)
    b = jax.random.uniform(kb, (1, num_outputs), jnp.float32, -bound, bound)
    # AddBias(torch.zeros(num_outputs)) -> logstd bias initialized to zeros.
    logstd = jnp.zeros((1, num_outputs), jnp.float32)

    x = jax.random.normal(kx, (B, num_inputs), jnp.float32)

    action_mean, action_logstd = diag_gaussian_forward(x, w, b, logstd)
    jax.block_until_ready((action_mean, action_logstd))

    # Reference check in plain JAX (f32 path must match the PyTorch Linear).
    ref_mean = x @ w + b
    ref_logstd = jnp.broadcast_to(logstd, (B, num_outputs))
    assert action_mean.shape == (B, num_outputs)
    assert action_logstd.shape == (B, num_outputs)
    assert jnp.allclose(action_mean, ref_mean, atol=1e-5, rtol=1e-5)
    assert jnp.allclose(action_logstd, ref_logstd, atol=1e-6)

    # Multi-tile path: batch not a tile multiple -> 2 grid steps + batch pad.
    B2 = 100
    x2 = jax.random.normal(kx2, (B2, num_inputs), jnp.float32)
    mean2, logstd2 = diag_gaussian_forward(x2, w, b, logstd)
    jax.block_until_ready((mean2, logstd2))
    assert mean2.shape == (B2, num_outputs)
    assert logstd2.shape == (B2, num_outputs)
    assert jnp.allclose(mean2, x2 @ w + b, atol=1e-5, rtol=1e-5)

    # bf16 operand path (halved HBM read traffic on v5e/v6e/v7x), f32 accumulate.
    mean3, _ = diag_gaussian_forward(x2, w, b, logstd, compute_dtype=jnp.bfloat16)
    jax.block_until_ready(mean3)
    assert mean3.shape == (B2, num_outputs)
    assert jnp.allclose(mean3, x2 @ w + b, atol=3e-2, rtol=3e-2)

    print("KERNEL_OK")
</pallas_src>

<mosaic_0001>
module attributes {stable_mosaic.version = 11 : i64} {
  func.func @diag_gaussian_kernel(%arg0: i32, %arg1: memref<8x32xf32, #tpu.memory_space<vmem>>, %arg2: memref<32x16xf32, #tpu.memory_space<vmem>>, %arg3: memref<1x16xf32, #tpu.memory_space<vmem>>, %arg4: memref<8x16xf32, #tpu.memory_space<vmem>>) attributes {dimension_semantics = [#tpu.dimension_semantics<parallel>], iteration_bounds = array<i64: 1>, scalar_prefetch = 0 : i64, scratch_operands = 0 : i64, tpu.core_type = #tpu.core_type<tc>, window_params = [{transform_indices = @transform_0, window_bounds = array<i64: 8, 32>}, {pipeline_mode = #tpu.pipeline_mode<synchronous>, transform_indices = @transform_1, window_bounds = array<i64: 32, 16>}, {pipeline_mode = #tpu.pipeline_mode<synchronous>, transform_indices = @transform_2, window_bounds = array<i64: 1, 16>}, {transform_indices = @transform_3, window_bounds = array<i64: 8, 16>}]} {
    %c0 = arith.constant 0 : index
    %c0_0 = arith.constant 0 : index
    %0 = vector.load %arg1[%c0, %c0_0] : memref<8x32xf32, #tpu.memory_space<vmem>>, vector<8x32xf32>
    %c0_1 = arith.constant 0 : index
    %c0_2 = arith.constant 0 : index
    %1 = vector.load %arg2[%c0_1, %c0_2] : memref<32x16xf32, #tpu.memory_space<vmem>>, vector<32x16xf32>
    %cst = arith.constant dense<0.000000e+00> : vector<8x16xf32>
    %2 = tpu.matmul %0, %1, %cst {dimension_numbers = #tpu.dot_dimension_numbers<[1], [0], [0], [1], [0, 0, 1, 1], [], []>} : vector<8x32xf32>, vector<32x16xf32>, vector<8x16xf32> -> vector<8x16xf32>
    %c0_3 = arith.constant 0 : index
    %c0_4 = arith.constant 0 : index
    %3 = vector.load %arg3[%c0_3, %c0_4] : memref<1x16xf32, #tpu.memory_space<vmem>>, vector<1x16xf32>
    %4 = vector.broadcast %3 : vector<1x16xf32> to vector<8x16xf32>
    %5 = arith.addf %2, %4 : vector<8x16xf32>
    %c0_5 = arith.constant 0 : index
    %c0_6 = arith.constant 0 : index
    %6 = vector.load %arg4[%c0_5, %c0_6] : memref<8x16xf32, #tpu.memory_space<vmem>>, vector<8x16xf32>
    tpu.vector_store %arg4[%c0_5, %c0_6], %5 {strides = array<i32>} : memref<8x16xf32, #tpu.memory_space<vmem>>, vector<8x16xf32>,
    return
  }
  func.func @transform_0(%arg0: i32) -> (i32, i32) {
    %c0_i32 = arith.constant 0 : i32
    %c0_i32_0 = arith.constant 0 : i32
    return %arg0, %c0_i32 : i32, i32
  }
  func.func @transform_1(%arg0: i32) -> (i32, i32) {
    %c0_i32 = arith.constant 0 : i32
    %c0_i32_0 = arith.constant 0 : i32
    %c0_i32_1 = arith.constant 0 : i32
    return %c0_i32, %c0_i32_0 : i32, i32
  }
  func.func @transform_2(%arg0: i32) -> (i32, i32) {
    %c0_i32 = arith.constant 0 : i32
    %c0_i32_0 = arith.constant 0 : i32
    %c0_i32_1 = arith.constant 0 : i32
    return %c0_i32, %c0_i32_0 : i32, i32
  }
  func.func @transform_3(%arg0: i32) -> (i32, i32) {
    %c0_i32 = arith.constant 0 : i32
    %c0_i32_0 = arith.constant 0 : i32
    return %arg0, %c0_i32 : i32, i32
  }
}

</mosaic_0001>

<llo_original>
// kernel: tpu_custom_call.1
$region0: #{tpu_custom_call.1}
  #allocation0 [shape = 'u32[]', space=smem, size = 0x4, offset = 0x4, fixed_abs, tag = 'smem constant byte address 0x4 - core index']
  #allocation1 [shape = 'u32[72,128]{1,0:T(1,128)}', space=vmem, size = 0x9000, scoped, tag = 'internal scratch']
  %s0 = inlined_call_operand.vmem [shape: f32[8,32], index: 0, kind: input, shape index: {}]
  %s1 = inlined_call_operand.vmem [shape: f32[32,16], index: 1, kind: input, shape index: {}]
  %s2 = inlined_call_operand.vmem [shape: f32[1,16], index: 2, kind: input, shape index: {}]
  %s3 = inlined_call_operand.hbm [shape: f32[8,16], index: 3, kind: output, shape index: {}]
  %s4 = sld [smem:[#allocation0]]
  $region22: #{tpu_custom_call.1} parent=0
    _
  %s6 = ssub.s32 1, %s4
  %s7 = scalar_select 0, %s6, %s4
  $region1: #{tpu_custom_call.1} parent=0
    #allocation2 [shape = 'u8[4096]{0}', space=vmem, size = 0x1000, scoped, tag = 'output window, operand 0, single buffered']
    #allocation3 [shape = 's32[1]{0}', space=sflag, size = 0x4, scoped, tag = 'scoped memory for tpu_custom_call.1']
    %8 = vsyncpa [#allocation3], 0
    // Predicated region
    $region2: #{tpu_custom_call.1} parent=1 // pred_check
      _
    $region3: #{tpu_custom_call.1} parent=1 // pred_check_branch
      %10 = sbr.rel (0) target = $region5
    $region4: #{tpu_custom_call.1} parent=1 // pred_region
      _
    $region5: #{tpu_custom_call.1} parent=1 // pred_fallthru
      _
    // Predicated region
    $region6: #{tpu_custom_call.1} parent=1 // pred_check
      _
    $region7: #{tpu_custom_call.1} parent=1 // pred_check_branch
      %12 = sbr.rel (0) target = $region9
    $region8: #{tpu_custom_call.1} parent=1 // pred_region
      _
    $region9: #{tpu_custom_call.1} parent=1 // pred_fallthru
      _
    // Predicated region
    $region10: #{tpu_custom_call.1} parent=1 // pred_check
      _
    $region11: #{tpu_custom_call.1} parent=1 // pred_check_branch
      %14 = sbr.rel (0) target = $region13
    $region12: #{tpu_custom_call.1} parent=1 // pred_region
      _
    $region13: #{tpu_custom_call.1} parent=1 // pred_fallthru
      _
    %v15 = vld [vmem:[%s0] sm:$0xff]
    %v16 = vld [vmem:[%s1] sm:$0xff]
    %v17 = vld [vmem:[%s1 + $0x8] sm:$0xff]
    %v18 = vld [vmem:[%s1 + $0x10] sm:$0xff]
    %v19 = vld [vmem:[%s1 + $0x18] sm:$0xff]
    %v20 = vld [vmem:[%s2] sm:$0x1]
    %v22 = vperm.slane %v20, 0
    %vm24 = vcmask 261120
    %v26 = vsel %vm24, %v15, 0
    %28 = vmatpush.msra.mxu0 0.0
    %29 = vmatpush.msra.mxu0 0.0
    %30 = vmatpush.msra.mxu0 0.0
    %31 = vmatpush.msra.mxu0 0.0
    %32 = vmatpush.msra.mxu0 0.0
    %33 = vmatpush.msra.mxu0 0.0
    %34 = vmatpush.msra.mxu0 0.0
    %35 = vmatpush.msra.mxu0 0.0
    %36 = vmatpush.msra.mxu0 0.0
    %37 = vmatpush.msra.mxu0 0.0
    %38 = vmatpush.msra.mxu0 0.0
    %39 = vmatpush.msra.mxu0 0.0
    %40 = vmatpush.msra.mxu0 %v19
    %41 = vmatpush.msra.mxu0 %v18
    %42 = vmatpush.msra.mxu0 %v17
    %43 = vmatpush.msra.mxu0 %v16
    %44 = vmatmul.f32.gmra.mxu0 %v26
    %v45 = vpop.f32.mrf.mxu0
    %v46 = vadd.f32 %v22, %v45
    %47 = vdwg.mxu0
    %vm48 = vcmask 130048
    %49 = vst.msk [vmem:[#allocation2] sm:$0xff] %vm48, %v46
    // Predicated region
    $region14: #{tpu_custom_call.1} parent=1 // pred_check
      _
    $region15: #{tpu_custom_call.1} parent=1 // pred_check_branch
      %51 = sbr.rel (0) target = $region17
    $region16: #{tpu_custom_call.1} parent=1 // pred_region
      %53 = vsyncadd [#allocation3], 0
      %s55 = sshll.u32 [#allocation2], 4
      %s56 = int_to_ptr.vmem [resolvable:$true] %s55
      %s57 = sshll.u32 %s3, 4
      %s58 = int_to_ptr.hbm [resolvable:$true] %s57
      %60 = dma.vmem_to_hbm [thread:$0]  %s56, 128, %s58, [#allocation3]
    $region17: #{tpu_custom_call.1} parent=1 // pred_fallthru
      _
    // Predicated region
    $region18: #{tpu_custom_call.1} parent=1 // pred_check
      _
    $region19: #{tpu_custom_call.1} parent=1 // pred_check_branch
      %62 = sbr.rel (0) target = $region21
    $region20: #{tpu_custom_call.1} parent=1 // pred_region
      %64 = dma.done [#allocation3], 128
    $region21: #{tpu_custom_call.1} parent=1 // pred_fallthru
      _
    %65 = vsyncpa [#allocation3], 1

</llo_original>
